<compile_context>
chip_gen: v7x
topology: tpu7x:2x2x1
jax: 0.10.0
libtpu: 0.0.40
codegen_flags: <defaults>
</compile_context>

<pallas_src>
import math
import functools

import jax
import jax.numpy as jnp
from jax.experimental import pallas as pl
from jax.experimental.pallas import tpu as pltpu


# --------------------------------------------------------------------------- #
# Kernels
# --------------------------------------------------------------------------- #
def qkv_proj_kernel(x_ref, wq_ref, wk_ref, wv_ref, bq_ref, bk_ref, bv_ref,
                    q_ref, k_ref, v_ref, *, heads):
    """Project one (batch, token-tile) of x into head-major Q (pre-scaled), K, V.

    Runs once per token tile, so the K/V projection GEMMs are NOT recomputed for
    every q-tile of the flash kernel.
    """
    xb = x_ref[0]                                      # (tp, W) bf16
    width = xb.shape[-1]
    ac = width // heads

    def project(w_ref, b_ref, out_ref):
        # bf16 MXU matmul, f32 accumulation + f32 bias add.
        t = jnp.dot(xb, w_ref[...], preferred_element_type=jnp.float32) + b_ref[...]
        t = t.astype(jnp.bfloat16)                     # (tp, W), head-major columns
        # One-time relayout to head-major (heads, tp, ac): the flash kernel's hot
        # per-kv-step loop then indexes the leading axis instead of slicing lanes.
        for h in range(heads):
            out_ref[0, h] = t[:, h * ac:(h + 1) * ac]

    project(wq_ref, bq_ref, q_ref)                     # Wq/bq carry the 1/sqrt(ac) scale
    project(wk_ref, bk_ref, k_ref)
    project(wv_ref, bv_ref, v_ref)


def flash_attn_kernel(q_ref, k_ref, v_ref, wp_ref, bp_ref, o_ref,
                      m_scr, l_scr, acc_scr, attn_scr,
                      *, heads, n_ctx, masked):
    """One (batch, q-tile, kv-tile) step: online-softmax attention + fused c_proj."""
    ki = pl.program_id(2)
    n_kv = pl.num_programs(2)
    tq = acc_scr.shape[1]
    tkv = k_ref.shape[2]
    ac = acc_scr.shape[2]

    # ---- init (first kv step): reset online-softmax state ----
    @pl.when(ki == 0)
    def _init():
        m_scr[...] = jnp.full(m_scr.shape, -jnp.inf, dtype=m_scr.dtype)
        l_scr[...] = jnp.zeros(l_scr.shape, dtype=l_scr.dtype)
        acc_scr[...] = jnp.zeros(acc_scr.shape, dtype=acc_scr.dtype)

    if masked:  # compile-time constant: only emitted when n_ctx was padded
        col = jax.lax.broadcasted_iota(jnp.int32, (tq, tkv), 1)
        kv_valid = (ki * tkv + col) < n_ctx

    # ---- online softmax per head (f32 softmax math, bf16 MXU operands) ----
    for h in range(heads):
        qh = q_ref[0, h]                               # (tq, ac)  leading-axis index: free
        kh = k_ref[0, h]                               # (tkv, ac)
        vh = v_ref[0, h]                               # (tkv, ac)
        s = jax.lax.dot_general(                       # (tq, tkv) f32
            qh, kh, dimension_numbers=(((1,), (1,)), ((), ())),
            preferred_element_type=jnp.float32)
        if masked:
            s = jnp.where(kv_valid, s, -jnp.inf)
        m_prev = m_scr[h]                              # (tq, 1)
        m_new = jnp.maximum(m_prev, jnp.max(s, axis=-1, keepdims=True))
        alpha = jnp.exp(m_prev - m_new)                # (tq, 1)
        p = jnp.exp(s - m_new)                         # (tq, tkv) f32
        l_scr[h] = alpha * l_scr[h] + jnp.sum(p, axis=-1, keepdims=True)
        acc_scr[h] = alpha * acc_scr[h] + jnp.dot(
            p.astype(jnp.bfloat16), vh, preferred_element_type=jnp.float32)
        m_scr[h] = m_new

    # ---- finalize: normalize, assemble heads, ONE wide c_proj matmul ----
    @pl.when(ki == n_kv - 1)
    def _finalize():
        for h in range(heads):
            inv_l = pl.reciprocal(l_scr[h], approx=True)            # EUP slot
            attn_scr[:, h * ac:(h + 1) * ac] = (acc_scr[h] * inv_l).astype(jnp.bfloat16)
        out = jnp.dot(attn_scr[...], wp_ref[...],                   # (tq, W) x (W, W)
                      preferred_element_type=jnp.float32) + bp_ref[...]
        o_ref[0] = out.astype(o_ref.dtype)


# --------------------------------------------------------------------------- #
# Helpers
# --------------------------------------------------------------------------- #
def _round_up(n, m):
    return ((n + m - 1) // m) * m


def _padded_bytes(shape, dtype):
    """Honest VMEM footprint: last dim padded to 128 lanes, second-last to the
    dtype's sublane multiple (8 for f32, 16 for bf16)."""
    itemsize = jnp.dtype(dtype).itemsize
    sublane = 8 * max(4 // itemsize, 1)
    dims = list(shape)
    if len(dims) >= 1:
        dims[-1] = _round_up(dims[-1], 128)
    if len(dims) >= 2:
        dims[-2] = _round_up(dims[-2], sublane)
    n = 1
    for d in dims:
        n *= d
    return n * itemsize


def _vmem_capacity_bytes():
    """Physical per-core VMEM; conservative v7x value (64 MiB) if the query fails."""
    if hasattr(pltpu, "get_tpu_info"):
        try:
            cap = getattr(pltpu.get_tpu_info(), "vmem_capacity_bytes", None)
            if cap:
                return int(cap)
        except Exception:   # guards only the info query; never masks kernel errors
            pass
    return 64 * 1024 * 1024


# --------------------------------------------------------------------------- #
# Wrapper
# --------------------------------------------------------------------------- #
def multihead_attention(x, wqkv_t, bqkv, wproj_t, bproj, heads,
                        *, q_tile=None, kv_tile=None):
    """MultiheadAttention forward.

    x        : (bs, n_ctx, width) float32
    wqkv_t   : (width, 3*width)  = c_qkv.weight.T  (PyTorch per-head interleaved [q|k|v])
    bqkv     : (3*width,)        = c_qkv.bias
    wproj_t  : (width, width)    = c_proj.weight.T
    bproj    : (width,)          = c_proj.bias
    """
    bs, n_ctx, width = x.shape
    assert width % heads == 0
    ac = width // heads

    # ---------- per-generation tiling / VMEM budget ----------
    cap = _vmem_capacity_bytes()
    budget = int(cap * 0.85)              # leave compiler / internal-scratch headroom
    if q_tile is None:
        q_tile = 256
    if kv_tile is None:
        kv_tile = 1024 if cap >= 96 * 1024 * 1024 else 512   # bigger kv tile on 128-MiB parts

    tq = min(q_tile, _round_up(n_ctx, 8))
    tkv = min(kv_tile, _round_up(n_ctx, 8))
    # Keep one padded sequence length valid for both tilings (larger tile is a
    # multiple of the smaller).
    if tq <= tkv:
        tkv = max(tq, (tkv // tq) * tq)
    else:
        tq = max(tkv, (tq // tkv) * tkv)
    tp = max(tq, tkv)                     # projection-kernel token tile
    n_pad = _round_up(n_ctx, tp)
    masked = n_pad != n_ctx

    # ---------- host-side parameter prep ----------
    # Regroup interleaved per-head [q|k|v] columns into head-major Q/K/V slabs, fold
    # the full 1/sqrt(ac) softmax scale into Wq/bq, cast MXU operands to bf16.
    w4 = wqkv_t.reshape(width, heads, 3, ac)
    b3 = bqkv.reshape(heads, 3, ac)
    scale = 1.0 / math.sqrt(ac)           # (1/sqrt(sqrt(ac)))^2, applied to Q only
    wq = (w4[:, :, 0, :].reshape(width, width) * scale).astype(jnp.bfloat16)
    wk = w4[:, :, 1, :].reshape(width, width).astype(jnp.bfloat16)
    wv = w4[:, :, 2, :].reshape(width, width).astype(jnp.bfloat16)
    bq = (b3[:, 0, :].reshape(1, width) * scale).astype(jnp.float32)
    bk = b3[:, 1, :].reshape(1, width).astype(jnp.float32)
    bv = b3[:, 2, :].reshape(1, width).astype(jnp.float32)
    wp = wproj_t.astype(jnp.bfloat16)
    bp = bproj.reshape(1, width).astype(jnp.float32)

    # bf16 x on the host halves the HBM read traffic (kernel is bf16-MXU anyway).
    x_bf = x.astype(jnp.bfloat16)
    if masked:
        x_bf = jnp.pad(x_bf, ((0, 0), (0, n_pad - n_ctx), (0, 0)))

    # ---------- stage 1: QKV projection (computed exactly once per token) ----------
    proj_est = (
        2 * _padded_bytes((tp, width), jnp.bfloat16)               # x block (double-buffered)
        + 3 * 2 * _padded_bytes((width, width), jnp.bfloat16)      # wq/wk/wv (2 bufs each)
        + 3 * 2 * _padded_bytes((1, width), jnp.float32)           # biases
        + 3 * 2 * _padded_bytes((heads, tp, ac), jnp.bfloat16)     # q/k/v output blocks
        + 3 * _padded_bytes((tp, width), jnp.float32)              # projection temporaries
    )
    proj_vmem = int(min(max(int(proj_est * 1.25), 32 * 1024 * 1024), budget))
    # TODO(synk): for width >= 4096 on v7x (64 MiB VMEM/TC) tile the (W, W) weight
    # BlockSpecs over output columns instead of keeping them fully resident.

    qkv_shape = jax.ShapeDtypeStruct((bs, heads, n_pad, ac), jnp.bfloat16)
    const2 = lambda b, i: (0, 0)
    q_hm, k_hm, v_hm = pl.pallas_call(
        functools.partial(qkv_proj_kernel, heads=heads),
        out_shape=(qkv_shape, qkv_shape, qkv_shape),
        grid=(bs, n_pad // tp),
        in_specs=[
            pl.BlockSpec((1, tp, width), lambda b, i: (b, i, 0)),  # x tile
            pl.BlockSpec((width, width), const2),                  # wq (pre-scaled)
            pl.BlockSpec((width, width), const2),                  # wk
            pl.BlockSpec((width, width), const2),                  # wv
            pl.BlockSpec((1, width), const2),                      # bq (pre-scaled)
            pl.BlockSpec((1, width), const2),                      # bk
            pl.BlockSpec((1, width), const2),                      # bv
        ],
        out_specs=(
            pl.BlockSpec((1, heads, tp, ac), lambda b, i: (b, 0, i, 0)),
            pl.BlockSpec((1, heads, tp, ac), lambda b, i: (b, 0, i, 0)),
            pl.BlockSpec((1, heads, tp, ac), lambda b, i: (b, 0, i, 0)),
        ),
        compiler_params=pltpu.CompilerParams(
            dimension_semantics=("parallel", "parallel"),
            vmem_limit_bytes=proj_vmem),
    )(x_bf, wq, wk, wv, bq, bk, bv)

    # ---------- stage 2: flash attention + fused output projection ----------
    flash_est = (
        2 * _padded_bytes((heads, tq, ac), jnp.bfloat16)             # q block
        + 2 * 2 * _padded_bytes((heads, tkv, ac), jnp.bfloat16)      # k, v blocks
        + 2 * _padded_bytes((width, width), jnp.bfloat16)            # wp (const index, 2 bufs)
        + 2 * _padded_bytes((1, width), jnp.float32)                 # bp
        + 2 * _padded_bytes((tq, width), x.dtype)                    # output block
        + 2 * _padded_bytes((heads, tq, 1), jnp.float32)             # m, l (lane-padded to 128)
        + _padded_bytes((heads, tq, ac), jnp.float32)                # acc scratch
        + _padded_bytes((tq, width), jnp.bfloat16)                   # head-assembly scratch
        + 3 * _padded_bytes((tq, tkv), jnp.float32)                  # s / p / mask temporaries
        + 2 * _padded_bytes((tq, width), jnp.float32)                # c_proj temporaries
    )
    flash_vmem = int(min(max(int(flash_est * 1.25), 32 * 1024 * 1024), budget))

    out = pl.pallas_call(
        functools.partial(flash_attn_kernel, heads=heads, n_ctx=n_ctx, masked=masked),
        out_shape=jax.ShapeDtypeStruct((bs, n_pad, width), x.dtype),
        grid=(bs, n_pad // tq, n_pad // tkv),
        in_specs=[
            pl.BlockSpec((1, heads, tq, ac), lambda b, qi, ki: (b, 0, qi, 0)),   # Q
            pl.BlockSpec((1, heads, tkv, ac), lambda b, qi, ki: (b, 0, ki, 0)),  # K
            pl.BlockSpec((1, heads, tkv, ac), lambda b, qi, ki: (b, 0, ki, 0)),  # V
            pl.BlockSpec((width, width), lambda b, qi, ki: (0, 0)),              # wproj
            pl.BlockSpec((1, width), lambda b, qi, ki: (0, 0)),                  # bproj
        ],
        out_specs=pl.BlockSpec((1, tq, width), lambda b, qi, ki: (b, qi, 0)),
        scratch_shapes=[
            pltpu.VMEM((heads, tq, 1), jnp.float32),     # running max
            pltpu.VMEM((heads, tq, 1), jnp.float32),     # running sum
            pltpu.VMEM((heads, tq, ac), jnp.float32),    # unnormalized attention acc
            pltpu.VMEM((tq, width), jnp.bfloat16),       # normalized heads -> c_proj input
        ],
        compiler_params=pltpu.CompilerParams(
            dimension_semantics=("parallel", "parallel", "arbitrary"),
            vmem_limit_bytes=flash_vmem),
    )(q_hm, k_hm, v_hm, wp, bp)

    if masked:
        out = out[:, :n_ctx, :]
    return out


# --------------------------------------------------------------------------- #
# Reference + test
# --------------------------------------------------------------------------- #
def reference(x, wqkv_t, bqkv, wproj_t, bproj, heads):
    """Pure-JAX f32 reference replicating the PyTorch module exactly."""
    bs, n_ctx, width = x.shape
    ac = width // heads
    scale = 1.0 / math.sqrt(math.sqrt(ac))
    qkv = x @ wqkv_t + bqkv                                   # (bs, n_ctx, 3*width)
    qkv = qkv.reshape(bs, n_ctx, heads, 3 * ac)
    q, k, v = qkv[..., :ac], qkv[..., ac:2 * ac], qkv[..., 2 * ac:]
    w = jnp.einsum('bthc,bshc->bhts', q * scale, k * scale)
    w = jax.nn.softmax(w.astype(jnp.float32), axis=-1)
    a = jnp.einsum('bhts,bshc->bthc', w, v).reshape(bs, n_ctx, width)
    return a @ wproj_t + bproj


if __name__ == "__main__":
    bs, n_ctx, width, heads = 2, 8, 32, 4

    key = jax.random.PRNGKey(0)
    kx, k1, k2, k3, k4 = jax.random.split(key, 5)

    x = jax.random.normal(kx, (bs, n_ctx, width), dtype=jnp.float32)

    # Deterministic nn.Linear-style init; weights stored pre-transposed (in, out),
    # QKV columns in the PyTorch interleaved per-head [q|k|v] layout.
    bound = 1.0 / math.sqrt(width)
    wqkv_t = jax.random.uniform(k1, (width, 3 * width), jnp.float32, -bound, bound)
    bqkv = jax.random.uniform(k2, (3 * width,), jnp.float32, -bound, bound)
    wproj_t = jax.random.uniform(k3, (width, width), jnp.float32, -bound, bound)
    bproj = jax.random.uniform(k4, (width,), jnp.float32, -bound, bound)

    out = multihead_attention(x, wqkv_t, bqkv, wproj_t, bproj, heads)
    out = jax.block_until_ready(out)

    ref = reference(x, wqkv_t, bqkv, wproj_t, bproj, heads)
    assert out.shape == (bs, n_ctx, width)
    max_err = float(jnp.max(jnp.abs(out - ref)))
    # Tolerance sized for bf16 MXU operands vs the f32 reference.
    assert jnp.allclose(out, ref, atol=2e-2, rtol=2e-2), \
        f"mismatch vs reference (max abs err {max_err})"

    print("KERNEL_OK")
</pallas_src>

<mosaic_0001>
module attributes {stable_mosaic.version = 11 : i64} {
  func.func @qkv_proj_kernel(%arg0: i32, %arg1: i32, %arg2: memref<1x8x32xbf16, #tpu.memory_space<vmem>>, %arg3: memref<32x32xbf16, #tpu.memory_space<vmem>>, %arg4: memref<32x32xbf16, #tpu.memory_space<vmem>>, %arg5: memref<32x32xbf16, #tpu.memory_space<vmem>>, %arg6: memref<1x32xf32, #tpu.memory_space<vmem>>, %arg7: memref<1x32xf32, #tpu.memory_space<vmem>>, %arg8: memref<1x32xf32, #tpu.memory_space<vmem>>, %arg9: memref<1x4x8x8xbf16, #tpu.memory_space<vmem>>, %arg10: memref<1x4x8x8xbf16, #tpu.memory_space<vmem>>, %arg11: memref<1x4x8x8xbf16, #tpu.memory_space<vmem>>) attributes {dimension_semantics = [#tpu.dimension_semantics<parallel>, #tpu.dimension_semantics<parallel>], iteration_bounds = array<i64: 2, 1>, scalar_prefetch = 0 : i64, scratch_operands = 0 : i64, tpu.core_type = #tpu.core_type<tc>, window_params = [{transform_indices = @transform_0, window_bounds = array<i64: 1, 8, 32>}, {pipeline_mode = #tpu.pipeline_mode<synchronous>, transform_indices = @transform_1, window_bounds = array<i64: 32, 32>}, {pipeline_mode = #tpu.pipeline_mode<synchronous>, transform_indices = @transform_2, window_bounds = array<i64: 32, 32>}, {pipeline_mode = #tpu.pipeline_mode<synchronous>, transform_indices = @transform_3, window_bounds = array<i64: 32, 32>}, {pipeline_mode = #tpu.pipeline_mode<synchronous>, transform_indices = @transform_4, window_bounds = array<i64: 1, 32>}, {pipeline_mode = #tpu.pipeline_mode<synchronous>, transform_indices = @transform_5, window_bounds = array<i64: 1, 32>}, {pipeline_mode = #tpu.pipeline_mode<synchronous>, transform_indices = @transform_6, window_bounds = array<i64: 1, 32>}, {transform_indices = @transform_7, window_bounds = array<i64: 1, 4, 8, 8>}, {transform_indices = @transform_8, window_bounds = array<i64: 1, 4, 8, 8>}, {transform_indices = @transform_9, window_bounds = array<i64: 1, 4, 8, 8>}]} {
    %c0 = arith.constant 0 : index
    %c0_0 = arith.constant 0 : index
    %c0_1 = arith.constant 0 : index
    %0 = vector.load %arg2[%c0, %c0_0, %c0_1] : memref<1x8x32xbf16, #tpu.memory_space<vmem>>, vector<1x8x32xbf16>
    %1 = vector.shape_cast %0 : vector<1x8x32xbf16> to vector<8x32xbf16>
    %c0_2 = arith.constant 0 : index
    %c0_3 = arith.constant 0 : index
    %2 = vector.load %arg3[%c0_2, %c0_3] : memref<32x32xbf16, #tpu.memory_space<vmem>>, vector<32x32xbf16>
    %cst = arith.constant dense<0.000000e+00> : vector<8x32xf32>
    %3 = tpu.matmul %1, %2, %cst {dimension_numbers = #tpu.dot_dimension_numbers<[1], [0], [0], [1], [0, 0, 1, 1], [], []>} : vector<8x32xbf16>, vector<32x32xbf16>, vector<8x32xf32> -> vector<8x32xf32>
    %c0_4 = arith.constant 0 : index
    %c0_5 = arith.constant 0 : index
    %4 = vector.load %arg6[%c0_4, %c0_5] : memref<1x32xf32, #tpu.memory_space<vmem>>, vector<1x32xf32>
    %5 = vector.broadcast %4 : vector<1x32xf32> to vector<8x32xf32>
    %6 = arith.addf %3, %5 : vector<8x32xf32>
    %7 = arith.truncf %6 : vector<8x32xf32> to vector<8x32xbf16>
    %8 = vector.extract_strided_slice %7 {offsets = [0, 0], sizes = [8, 8], strides = [1, 1]} : vector<8x32xbf16> to vector<8x8xbf16>
    %c0_6 = arith.constant 0 : index
    %c0_7 = arith.constant 0 : index
    %c0_8 = arith.constant 0 : index
    %c0_9 = arith.constant 0 : index
    %9 = vector.load %arg9[%c0_6, %c0_7, %c0_8, %c0_9] : memref<1x4x8x8xbf16, #tpu.memory_space<vmem>>, vector<1x1x8x8xbf16>
    %10 = vector.shape_cast %9 : vector<1x1x8x8xbf16> to vector<8x8xbf16>
    %11 = vector.shape_cast %8 : vector<8x8xbf16> to vector<1x1x8x8xbf16>
    tpu.vector_store %arg9[%c0_6, %c0_7, %c0_8, %c0_9], %11 {strides = array<i32>} : memref<1x4x8x8xbf16, #tpu.memory_space<vmem>>, vector<1x1x8x8xbf16>,
    %12 = vector.extract_strided_slice %7 {offsets = [0, 8], sizes = [8, 8], strides = [1, 1]} : vector<8x32xbf16> to vector<8x8xbf16>
    %c0_10 = arith.constant 0 : index
    %c1 = arith.constant 1 : index
    %c0_11 = arith.constant 0 : index
    %c0_12 = arith.constant 0 : index
    %13 = vector.load %arg9[%c0_10, %c1, %c0_11, %c0_12] : memref<1x4x8x8xbf16, #tpu.memory_space<vmem>>, vector<1x1x8x8xbf16>
    %14 = vector.shape_cast %13 : vector<1x1x8x8xbf16> to vector<8x8xbf16>
    %15 = vector.shape_cast %12 : vector<8x8xbf16> to vector<1x1x8x8xbf16>
    tpu.vector_store %arg9[%c0_10, %c1, %c0_11, %c0_12], %15 {strides = array<i32>} : memref<1x4x8x8xbf16, #tpu.memory_space<vmem>>, vector<1x1x8x8xbf16>,
    %16 = vector.extract_strided_slice %7 {offsets = [0, 16], sizes = [8, 8], strides = [1, 1]} : vector<8x32xbf16> to vector<8x8xbf16>
    %c0_13 = arith.constant 0 : index
    %c2 = arith.constant 2 : index
    %c0_14 = arith.constant 0 : index
    %c0_15 = arith.constant 0 : index
    %17 = vector.load %arg9[%c0_13, %c2, %c0_14, %c0_15] : memref<1x4x8x8xbf16, #tpu.memory_space<vmem>>, vector<1x1x8x8xbf16>
    %18 = vector.shape_cast %17 : vector<1x1x8x8xbf16> to vector<8x8xbf16>
    %19 = vector.shape_cast %16 : vector<8x8xbf16> to vector<1x1x8x8xbf16>
    tpu.vector_store %arg9[%c0_13, %c2, %c0_14, %c0_15], %19 {strides = array<i32>} : memref<1x4x8x8xbf16, #tpu.memory_space<vmem>>, vector<1x1x8x8xbf16>,
    %20 = vector.extract_strided_slice %7 {offsets = [0, 24], sizes = [8, 8], strides = [1, 1]} : vector<8x32xbf16> to vector<8x8xbf16>
    %c0_16 = arith.constant 0 : index
    %c3 = arith.constant 3 : index
    %c0_17 = arith.constant 0 : index
    %c0_18 = arith.constant 0 : index
    %21 = vector.load %arg9[%c0_16, %c3, %c0_17, %c0_18] : memref<1x4x8x8xbf16, #tpu.memory_space<vmem>>, vector<1x1x8x8xbf16>
    %22 = vector.shape_cast %21 : vector<1x1x8x8xbf16> to vector<8x8xbf16>
    %23 = vector.shape_cast %20 : vector<8x8xbf16> to vector<1x1x8x8xbf16>
    tpu.vector_store %arg9[%c0_16, %c3, %c0_17, %c0_18], %23 {strides = array<i32>} : memref<1x4x8x8xbf16, #tpu.memory_space<vmem>>, vector<1x1x8x8xbf16>,
    %c0_19 = arith.constant 0 : index
    %c0_20 = arith.constant 0 : index
    %24 = vector.load %arg4[%c0_19, %c0_20] : memref<32x32xbf16, #tpu.memory_space<vmem>>, vector<32x32xbf16>
    %cst_21 = arith.constant dense<0.000000e+00> : vector<8x32xf32>
    %25 = tpu.matmul %1, %24, %cst_21 {dimension_numbers = #tpu.dot_dimension_numbers<[1], [0], [0], [1], [0, 0, 1, 1], [], []>} : vector<8x32xbf16>, vector<32x32xbf16>, vector<8x32xf32> -> vector<8x32xf32>
    %c0_22 = arith.constant 0 : index
    %c0_23 = arith.constant 0 : index
    %26 = vector.load %arg7[%c0_22, %c0_23] : memref<1x32xf32, #tpu.memory_space<vmem>>, vector<1x32xf32>
    %27 = vector.broadcast %26 : vector<1x32xf32> to vector<8x32xf32>
    %28 = arith.addf %25, %27 : vector<8x32xf32>
    %29 = arith.truncf %28 : vector<8x32xf32> to vector<8x32xbf16>
    %30 = vector.extract_strided_slice %29 {offsets = [0, 0], sizes = [8, 8], strides = [1, 1]} : vector<8x32xbf16> to vector<8x8xbf16>
    %c0_24 = arith.constant 0 : index
    %c0_25 = arith.constant 0 : index
    %c0_26 = arith.constant 0 : index
    %c0_27 = arith.constant 0 : index
    %31 = vector.load %arg10[%c0_24, %c0_25, %c0_26, %c0_27] : memref<1x4x8x8xbf16, #tpu.memory_space<vmem>>, vector<1x1x8x8xbf16>
    %32 = vector.shape_cast %31 : vector<1x1x8x8xbf16> to vector<8x8xbf16>
    %33 = vector.shape_cast %30 : vector<8x8xbf16> to vector<1x1x8x8xbf16>
    tpu.vector_store %arg10[%c0_24, %c0_25, %c0_26, %c0_27], %33 {strides = array<i32>} : memref<1x4x8x8xbf16, #tpu.memory_space<vmem>>, vector<1x1x8x8xbf16>,
    %34 = vector.extract_strided_slice %29 {offsets = [0, 8], sizes = [8, 8], strides = [1, 1]} : vector<8x32xbf16> to vector<8x8xbf16>
    %c0_28 = arith.constant 0 : index
    %c1_29 = arith.constant 1 : index
    %c0_30 = arith.constant 0 : index
    %c0_31 = arith.constant 0 : index
    %35 = vector.load %arg10[%c0_28, %c1_29, %c0_30, %c0_31] : memref<1x4x8x8xbf16, #tpu.memory_space<vmem>>, vector<1x1x8x8xbf16>
    %36 = vector.shape_cast %35 : vector<1x1x8x8xbf16> to vector<8x8xbf16>
    %37 = vector.shape_cast %34 : vector<8x8xbf16> to vector<1x1x8x8xbf16>
    tpu.vector_store %arg10[%c0_28, %c1_29, %c0_30, %c0_31], %37 {strides = array<i32>} : memref<1x4x8x8xbf16, #tpu.memory_space<vmem>>, vector<1x1x8x8xbf16>,
    %38 = vector.extract_strided_slice %29 {offsets = [0, 16], sizes = [8, 8], strides = [1, 1]} : vector<8x32xbf16> to vector<8x8xbf16>
    %c0_32 = arith.constant 0 : index
    %c2_33 = arith.constant 2 : index
    %c0_34 = arith.constant 0 : index
    %c0_35 = arith.constant 0 : index
    %39 = vector.load %arg10[%c0_32, %c2_33, %c0_34, %c0_35] : memref<1x4x8x8xbf16, #tpu.memory_space<vmem>>, vector<1x1x8x8xbf16>
    %40 = vector.shape_cast %39 : vector<1x1x8x8xbf16> to vector<8x8xbf16>
    %41 = vector.shape_cast %38 : vector<8x8xbf16> to vector<1x1x8x8xbf16>
    tpu.vector_store %arg10[%c0_32, %c2_33, %c0_34, %c0_35], %41 {strides = array<i32>} : memref<1x4x8x8xbf16, #tpu.memory_space<vmem>>, vector<1x1x8x8xbf16>,
    %42 = vector.extract_strided_slice %29 {offsets = [0, 24], sizes = [8, 8], strides = [1, 1]} : vector<8x32xbf16> to vector<8x8xbf16>
    %c0_36 = arith.constant 0 : index
    %c3_37 = arith.constant 3 : index
    %c0_38 = arith.constant 0 : index
    %c0_39 = arith.constant 0 : index
    %43 = vector.load %arg10[%c0_36, %c3_37, %c0_38, %c0_39] : memref<1x4x8x8xbf16, #tpu.memory_space<vmem>>, vector<1x1x8x8xbf16>
    %44 = vector.shape_cast %43 : vector<1x1x8x8xbf16> to vector<8x8xbf16>
    %45 = vector.shape_cast %42 : vector<8x8xbf16> to vector<1x1x8x8xbf16>
    tpu.vector_store %arg10[%c0_36, %c3_37, %c0_38, %c0_39], %45 {strides = array<i32>} : memref<1x4x8x8xbf16, #tpu.memory_space<vmem>>, vector<1x1x8x8xbf16>,
    %c0_40 = arith.constant 0 : index
    %c0_41 = arith.constant 0 : index
    %46 = vector.load %arg5[%c0_40, %c0_41] : memref<32x32xbf16, #tpu.memory_space<vmem>>, vector<32x32xbf16>
    %cst_42 = arith.constant dense<0.000000e+00> : vector<8x32xf32>
    %47 = tpu.matmul %1, %46, %cst_42 {dimension_numbers = #tpu.dot_dimension_numbers<[1], [0], [0], [1], [0, 0, 1, 1], [], []>} : vector<8x32xbf16>, vector<32x32xbf16>, vector<8x32xf32> -> vector<8x32xf32>
    %c0_43 = arith.constant 0 : index
    %c0_44 = arith.constant 0 : index
    %48 = vector.load %arg8[%c0_43, %c0_44] : memref<1x32xf32, #tpu.memory_space<vmem>>, vector<1x32xf32>
    %49 = vector.broadcast %48 : vector<1x32xf32> to vector<8x32xf32>
    %50 = arith.addf %47, %49 : vector<8x32xf32>
    %51 = arith.truncf %50 : vector<8x32xf32> to vector<8x32xbf16>
    %52 = vector.extract_strided_slice %51 {offsets = [0, 0], sizes = [8, 8], strides = [1, 1]} : vector<8x32xbf16> to vector<8x8xbf16>
    %c0_45 = arith.constant 0 : index
    %c0_46 = arith.constant 0 : index
    %c0_47 = arith.constant 0 : index
    %c0_48 = arith.constant 0 : index
    %53 = vector.load %arg11[%c0_45, %c0_46, %c0_47, %c0_48] : memref<1x4x8x8xbf16, #tpu.memory_space<vmem>>, vector<1x1x8x8xbf16>
    %54 = vector.shape_cast %53 : vector<1x1x8x8xbf16> to vector<8x8xbf16>
    %55 = vector.shape_cast %52 : vector<8x8xbf16> to vector<1x1x8x8xbf16>
    tpu.vector_store %arg11[%c0_45, %c0_46, %c0_47, %c0_48], %55 {strides = array<i32>} : memref<1x4x8x8xbf16, #tpu.memory_space<vmem>>, vector<1x1x8x8xbf16>,
    %56 = vector.extract_strided_slice %51 {offsets = [0, 8], sizes = [8, 8], strides = [1, 1]} : vector<8x32xbf16> to vector<8x8xbf16>
    %c0_49 = arith.constant 0 : index
    %c1_50 = arith.constant 1 : index
    %c0_51 = arith.constant 0 : index
    %c0_52 = arith.constant 0 : index
    %57 = vector.load %arg11[%c0_49, %c1_50, %c0_51, %c0_52] : memref<1x4x8x8xbf16, #tpu.memory_space<vmem>>, vector<1x1x8x8xbf16>
    %58 = vector.shape_cast %57 : vector<1x1x8x8xbf16> to vector<8x8xbf16>
    %59 = vector.shape_cast %56 : vector<8x8xbf16> to vector<1x1x8x8xbf16>
    tpu.vector_store %arg11[%c0_49, %c1_50, %c0_51, %c0_52], %59 {strides = array<i32>} : memref<1x4x8x8xbf16, #tpu.memory_space<vmem>>, vector<1x1x8x8xbf16>,
    %60 = vector.extract_strided_slice %51 {offsets = [0, 16], sizes = [8, 8], strides = [1, 1]} : vector<8x32xbf16> to vector<8x8xbf16>
    %c0_53 = arith.constant 0 : index
    %c2_54 = arith.constant 2 : index
    %c0_55 = arith.constant 0 : index
    %c0_56 = arith.constant 0 : index
    %61 = vector.load %arg11[%c0_53, %c2_54, %c0_55, %c0_56] : memref<1x4x8x8xbf16, #tpu.memory_space<vmem>>, vector<1x1x8x8xbf16>
    %62 = vector.shape_cast %61 : vector<1x1x8x8xbf16> to vector<8x8xbf16>
    %63 = vector.shape_cast %60 : vector<8x8xbf16> to vector<1x1x8x8xbf16>
    tpu.vector_store %arg11[%c0_53, %c2_54, %c0_55, %c0_56], %63 {strides = array<i32>} : memref<1x4x8x8xbf16, #tpu.memory_space<vmem>>, vector<1x1x8x8xbf16>,
    %64 = vector.extract_strided_slice %51 {offsets = [0, 24], sizes = [8, 8], strides = [1, 1]} : vector<8x32xbf16> to vector<8x8xbf16>
    %c0_57 = arith.constant 0 : index
    %c3_58 = arith.constant 3 : index
    %c0_59 = arith.constant 0 : index
    %c0_60 = arith.constant 0 : index
    %65 = vector.load %arg11[%c0_57, %c3_58, %c0_59, %c0_60] : memref<1x4x8x8xbf16, #tpu.memory_space<vmem>>, vector<1x1x8x8xbf16>
    %66 = vector.shape_cast %65 : vector<1x1x8x8xbf16> to vector<8x8xbf16>
    %67 = vector.shape_cast %64 : vector<8x8xbf16> to vector<1x1x8x8xbf16>
    tpu.vector_store %arg11[%c0_57, %c3_58, %c0_59, %c0_60], %67 {strides = array<i32>} : memref<1x4x8x8xbf16, #tpu.memory_space<vmem>>, vector<1x1x8x8xbf16>,
    return
  }
  func.func @transform_0(%arg0: i32, %arg1: i32) -> (i32, i32, i32) {
    %c0_i32 = arith.constant 0 : i32
    %c0_i32_0 = arith.constant 0 : i32
    return %arg0, %arg1, %c0_i32 : i32, i32, i32
  }
  func.func @transform_1(%arg0: i32, %arg1: i32) -> (i32, i32) {
    %c0_i32 = arith.constant 0 : i32
    %c0_i32_0 = arith.constant 0 : i32
    %c0_i32_1 = arith.constant 0 : i32
    return %c0_i32, %c0_i32_0 : i32, i32
  }
  func.func @transform_2(%arg0: i32, %arg1: i32) -> (i32, i32) {
    %c0_i32 = arith.constant 0 : i32
    %c0_i32_0 = arith.constant 0 : i32
    %c0_i32_1 = arith.constant 0 : i32
    return %c0_i32, %c0_i32_0 : i32, i32
  }
  func.func @transform_3(%arg0: i32, %arg1: i32) -> (i32, i32) {
    %c0_i32 = arith.constant 0 : i32
    %c0_i32_0 = arith.constant 0 : i32
    %c0_i32_1 = arith.constant 0 : i32
    return %c0_i32, %c0_i32_0 : i32, i32
  }
  func.func @transform_4(%arg0: i32, %arg1: i32) -> (i32, i32) {
    %c0_i32 = arith.constant 0 : i32
    %c0_i32_0 = arith.constant 0 : i32
    %c0_i32_1 = arith.constant 0 : i32
    return %c0_i32, %c0_i32_0 : i32, i32
  }
  func.func @transform_5(%arg0: i32, %arg1: i32) -> (i32, i32) {
    %c0_i32 = arith.constant 0 : i32
    %c0_i32_0 = arith.constant 0 : i32
    %c0_i32_1 = arith.constant 0 : i32
    return %c0_i32, %c0_i32_0 : i32, i32
  }
  func.func @transform_6(%arg0: i32, %arg1: i32) -> (i32, i32) {
    %c0_i32 = arith.constant 0 : i32
    %c0_i32_0 = arith.constant 0 : i32
    %c0_i32_1 = arith.constant 0 : i32
    return %c0_i32, %c0_i32_0 : i32, i32
  }
  func.func @transform_7(%arg0: i32, %arg1: i32) -> (i32, i32, i32, i32) {
    %c0_i32 = arith.constant 0 : i32
    %c0_i32_0 = arith.constant 0 : i32
    %c0_i32_1 = arith.constant 0 : i32
    return %arg0, %c0_i32, %arg1, %c0_i32_0 : i32, i32, i32, i32
  }
  func.func @transform_8(%arg0: i32, %arg1: i32) -> (i32, i32, i32, i32) {
    %c0_i32 = arith.constant 0 : i32
    %c0_i32_0 = arith.constant 0 : i32
    %c0_i32_1 = arith.constant 0 : i32
    return %arg0, %c0_i32, %arg1, %c0_i32_0 : i32, i32, i32, i32
  }
  func.func @transform_9(%arg0: i32, %arg1: i32) -> (i32, i32, i32, i32) {
    %c0_i32 = arith.constant 0 : i32
    %c0_i32_0 = arith.constant 0 : i32
    %c0_i32_1 = arith.constant 0 : i32
    return %arg0, %c0_i32, %arg1, %c0_i32_0 : i32, i32, i32, i32
  }
}

</mosaic_0001>

<llo_original>
// kernel: tpu_custom_call.1
$region0: #{tpu_custom_call.1}
  #allocation0 [shape = 'u32[]', space=smem, size = 0x4, offset = 0x4, fixed_abs, tag = 'smem constant byte address 0x4 - core index']
  #allocation1 [shape = 'u32[144,128]{1,0:T(1,128)}', space=vmem, size = 0x12000, scoped, tag = 'internal scratch']
  %s0 = inlined_call_operand.hbm [shape: bf16[2,8,32], index: 0, kind: input, shape index: {}]
  %s1 = inlined_call_operand.hbm [shape: bf16[32,32], index: 1, kind: input, shape index: {}]
  %s2 = inlined_call_operand.hbm [shape: bf16[32,32], index: 2, kind: input, shape index: {}]
  %s3 = inlined_call_operand.hbm [shape: bf16[32,32], index: 3, kind: input, shape index: {}]
  %s4 = inlined_call_operand.vmem [shape: f32[1,32], index: 4, kind: input, shape index: {}]
  %s5 = inlined_call_operand.vmem [shape: f32[1,32], index: 5, kind: input, shape index: {}]
  %s6 = inlined_call_operand.vmem [shape: f32[1,32], index: 6, kind: input, shape index: {}]
  %s7 = inlined_call_operand.hbm [shape: bf16[2,4,8,8], index: 7, kind: output, shape index: {0}]
  %s8 = inlined_call_operand.hbm [shape: bf16[2,4,8,8], index: 8, kind: output, shape index: {1}]
  %s9 = inlined_call_operand.hbm [shape: bf16[2,4,8,8], index: 9, kind: output, shape index: {2}]
  %10 = xla_tuple %s7, %s8, %s9
  %s11 = sld [smem:[#allocation0]]
  $region93: #{tpu_custom_call.1} parent=0
    _
  %s13 = ssub.s32 1, %s11
  %s14 = scalar_select 0, %s13, %s11
  $region1: #{tpu_custom_call.1} parent=0
    #allocation2 [shape = 'u8[4096]{0}', space=vmem, size = 0x1000, scoped, tag = 'input window, operand 0']
    #allocation3 [shape = 's32[2]{0}', space=sflag, size = 0x8, scoped, tag = 'scoped memory for tpu_custom_call.1']
    #allocation4 [shape = 's32[2]{0}', space=sflag, size = 0x8, scoped, tag = 'scoped memory for tpu_custom_call.1']
    #allocation5 [shape = 'u8[8192]{0}', space=vmem, size = 0x2000, scoped, tag = 'input window, operand 1, single buffered']
    #allocation6 [shape = 's32[1]{0}', space=sflag, size = 0x4, scoped, tag = 'scoped memory for tpu_custom_call.1']
    #allocation7 [shape = 'u8[8192]{0}', space=vmem, size = 0x2000, scoped, tag = 'input window, operand 2, single buffered']
    #allocation8 [shape = 'u8[8192]{0}', space=vmem, size = 0x2000, scoped, tag = 'input window, operand 3, single buffered']
    #allocation9 [shape = 's32[1]{0}', space=sflag, size = 0x4, scoped, tag = 'scoped memory for tpu_custom_call.1']
    #allocation10 [shape = 'u8[16384]{0}', space=vmem, size = 0x4000, scoped, tag = 'output window, operand 0']
    #allocation11 [shape = 'u8[16384]{0}', space=vmem, size = 0x4000, scoped, tag = 'output window, operand 1']
    #allocation12 [shape = 's32[2]{0}', space=sflag, size = 0x8, scoped, tag = 'scoped memory for tpu_custom_call.1']
    #allocation13 [shape = 'u8[16384]{0}', space=vmem, size = 0x4000, scoped, tag = 'output window, operand 2']
    %15 = vsyncpa [#allocation3], 0
    %s16 = scalar_lea.sflag [#allocation3], 1
    %17 = vsyncpa %s16, 0
    %18 = vsyncpa [#allocation6], 0
    %19 = vsyncpa [#allocation9], 0
    %20 = vsyncpa [#allocation4], 0
    %s21 = scalar_lea.sflag [#allocation4], 1
    %22 = vsyncpa %s21, 0
    %23 = vsyncpa [#allocation12], 0
    %s24 = scalar_lea.sflag [#allocation12], 1
    %25 = vsyncpa %s24, 0
    loop: start=0, step=1, limit=4
    $region2: #{tpu_custom_call.1} parent=1 // loop_pre_header
      _
    $region3: #{tpu_custom_call.1} parent=1 // loop_header
      %s27 = sphi 0, %s31
      %p28 = scmp.ge.s32.totalorder %s27, 4
      %s34 = sphi 0, %s46
      %s35 = sphi 0, %s42
      %s36 = sphi 0, %s34
      %s37 = sphi 0, %s35
      %s38 = sphi 0, %s36
      %s39 = sphi 0, %s37
      %s51 = sphi 0, %s53
      %s54 = sphi 0, %s51
      %s55 = sphi 0, %s54
      %s71 = sphi 0, %s55
      %s75 = sphi 0, %s75
      %s77 = sphi 0, %s75
      %s78 = sphi 0, %s77
      %s92 = sphi 0, %s78
      %s96 = sphi 0, %s96
      %s98 = sphi 0, %s96
      %s99 = sphi 0, %s98
      %s113 = sphi 0, %s99
      %s117 = sphi 0, %s117
      %s119 = sphi 0, %s117
      %s120 = sphi 0, %s119
      %s134 = sphi 0, %s120
      %s138 = sphi 0, %s138
      %s140 = sphi 0, %s138
      %s141 = sphi 0, %s140
      %s155 = sphi 0, %s141
      %s159 = sphi 0, %s159
      %s161 = sphi 0, %s159
      %s162 = sphi 0, %s161
      %s176 = sphi 0, %s162
      %s180 = sphi 0, %s180
      %s182 = sphi 0, %s180
      %s183 = sphi 0, %s182
      %s197 = sphi 0, %s183
      %s205 = sphi 0, %s207
      %s208 = sphi 0, %s205
      %s209 = sphi 0, %s208
      %s225 = sphi 0, %s209
      %s233 = sphi 0, %s235
      %s236 = sphi 0, %s233
      %s237 = sphi 0, %s236
      %s253 = sphi 0, %s237
      %s261 = sphi 0, %s263
      %s264 = sphi 0, %s261
      %s265 = sphi 0, %s264
      %s281 = sphi 0, %s265
    $region4: #{tpu_custom_call.1} parent=1 // loop_header_branch
      %30 = sbr.rel (%p28) target = $region8
    $region5: #{tpu_custom_call.1} parent=1 // loop_body
      %s32 = ssub.s32 %s27, 1
      %s33 = ssub.s32 %s27, 2
      %s40 = sadd.s32 1, %s35
      %p41 = scmp.ge.s32.totalorder %s40, 1
      %s42 = scalar_select %p41, 0, %s40
      %s43 = sadd.s32 1, %s34
      %s44 = scalar_select %p41, %s43, %s34
      %p45 = scmp.ge.s32.totalorder %s44, 2
      %s46 = scalar_select %p45, 0, %s44
      %s47 = ssub.s32 %s34, %s46
      %s48 = ssub.s32 %s35, %s42
      %s49 = sor.u32 %s47, %s48
      %p50 = scmp.eq.s32.totalorder %s49, 0
      %s52 = sadd.s32 %s51, 1
      %s53 = scalar_select %p50, %s51, %s52
      %p56 = pneg %p50
      %p57 = scmp.eq.s32.totalorder %s27, 1
      %p58 = por %p56, %p57
      %p59 = scmp.ne.s32.totalorder %s51, %s54
      %p60 = scmp.eq.s32.totalorder %s27, 0
      %p61 = por %p59, %p60
      %p62 = scmp.ne.s32.totalorder %s51, %s54
      %p63 = scmp.eq.s32.totalorder %s32, 1
      %p64 = por %p62, %p63
      %p65 = scmp.ne.s32.totalorder %s54, %s55
      %p66 = scmp.eq.s32.totalorder %s32, 0
      %p67 = por %p65, %p66
      %p68 = scmp.ne.s32.totalorder %s54, %s55
      %p69 = scmp.eq.s32.totalorder %s33, 1
      %p70 = por %p68, %p69
      %p72 = scmp.ne.s32.totalorder %s55, %s71
      %p73 = scmp.eq.s32.totalorder %s33, 0
      %p74 = por %p72, %p73
      %s76 = sadd.s32 %s75, 1
      %p79 = scmp.eq.s32.totalorder %s27, 1
      %p80 = scmp.ne.s32.totalorder %s75, %s77
      %p81 = scmp.eq.s32.totalorder %s27, 0
      %p82 = por %p80, %p81
      %p83 = scmp.ne.s32.totalorder %s75, %s77
      %p84 = scmp.eq.s32.totalorder %s32, 1
      %p85 = por %p83, %p84
      %p86 = scmp.ne.s32.totalorder %s77, %s78
      %p87 = scmp.eq.s32.totalorder %s32, 0
      %p88 = por %p86, %p87
      %p89 = scmp.ne.s32.totalorder %s77, %s78
      %p90 = scmp.eq.s32.totalorder %s33, 1
      %p91 = por %p89, %p90
      %p93 = scmp.ne.s32.totalorder %s78, %s92
      %p94 = scmp.eq.s32.totalorder %s33, 0
      %p95 = por %p93, %p94
      %s97 = sadd.s32 %s96, 1
      %p100 = scmp.eq.s32.totalorder %s27, 1
      %p101 = scmp.ne.s32.totalorder %s96, %s98
      %p102 = scmp.eq.s32.totalorder %s27, 0
      %p103 = por %p101, %p102
      %p104 = scmp.ne.s32.totalorder %s96, %s98
      %p105 = scmp.eq.s32.totalorder %s32, 1
      %p106 = por %p104, %p105
      %p107 = scmp.ne.s32.totalorder %s98, %s99
      %p108 = scmp.eq.s32.totalorder %s32, 0
      %p109 = por %p107, %p108
      %p110 = scmp.ne.s32.totalorder %s98, %s99
      %p111 = scmp.eq.s32.totalorder %s33, 1
      %p112 = por %p110, %p111
      %p114 = scmp.ne.s32.totalorder %s99, %s113
      %p115 = scmp.eq.s32.totalorder %s33, 0
      %p116 = por %p114, %p115
      %s118 = sadd.s32 %s117, 1
      %p121 = scmp.eq.s32.totalorder %s27, 1
      %p122 = scmp.ne.s32.totalorder %s117, %s119
      %p123 = scmp.eq.s32.totalorder %s27, 0
      %p124 = por %p122, %p123
      %p125 = scmp.ne.s32.totalorder %s117, %s119
      %p126 = scmp.eq.s32.totalorder %s32, 1
      %p127 = por %p125, %p126
      %p128 = scmp.ne.s32.totalorder %s119, %s120
      %p129 = scmp.eq.s32.totalorder %s32, 0
      %p130 = por %p128, %p129
      %p131 = scmp.ne.s32.totalorder %s119, %s120
      %p132 = scmp.eq.s32.totalorder %s33, 1
      %p133 = por %p131, %p132
      %p135 = scmp.ne.s32.totalorder %s120, %s134
      %p136 = scmp.eq.s32.totalorder %s33, 0
      %p137 = por %p135, %p136
      %s139 = sadd.s32 %s138, 1
      %p142 = scmp.eq.s32.totalorder %s27, 1
      %p143 = scmp.ne.s32.totalorder %s138, %s140
      %p144 = scmp.eq.s32.totalorder %s27, 0
      %p145 = por %p143, %p144
      %p146 = scmp.ne.s32.totalorder %s138, %s140
      %p147 = scmp.eq.s32.totalorder %s32, 1
      %p148 = por %p146, %p147
      %p149 = scmp.ne.s32.totalorder %s140, %s141
      %p150 = scmp.eq.s32.totalorder %s32, 0
      %p151 = por %p149, %p150
      %p152 = scmp.ne.s32.totalorder %s140, %s141
      %p153 = scmp.eq.s32.totalorder %s33, 1
      %p154 = por %p152, %p153
      %p156 = scmp.ne.s32.totalorder %s141, %s155
      %p157 = scmp.eq.s32.totalorder %s33, 0
      %p158 = por %p156, %p157
      %s160 = sadd.s32 %s159, 1
      %p163 = scmp.eq.s32.totalorder %s27, 1
      %p164 = scmp.ne.s32.totalorder %s159, %s161
      %p165 = scmp.eq.s32.totalorder %s27, 0
      %p166 = por %p164, %p165
      %p167 = scmp.ne.s32.totalorder %s159, %s161
      %p168 = scmp.eq.s32.totalorder %s32, 1
      %p169 = por %p167, %p168
      %p170 = scmp.ne.s32.totalorder %s161, %s162
      %p171 = scmp.eq.s32.totalorder %s32, 0
      %p172 = por %p170, %p171
      %p173 = scmp.ne.s32.totalorder %s161, %s162
      %p174 = scmp.eq.s32.totalorder %s33, 1
      %p175 = por %p173, %p174
      %p177 = scmp.ne.s32.totalorder %s162, %s176
      %p178 = scmp.eq.s32.totalorder %s33, 0
      %p179 = por %p177, %p178
      %s181 = sadd.s32 %s180, 1
      %p184 = scmp.eq.s32.totalorder %s27, 1
      %p185 = scmp.ne.s32.totalorder %s180, %s182
      %p186 = scmp.eq.s32.totalorder %s27, 0
      %p187 = por %p185, %p186
      %p188 = scmp.ne.s32.totalorder %s180, %s182
      %p189 = scmp.eq.s32.totalorder %s32, 1
      %p190 = por %p188, %p189
      %p191 = scmp.ne.s32.totalorder %s182, %s183
      %p192 = scmp.eq.s32.totalorder %s32, 0
      %p193 = por %p191, %p192
      %p194 = scmp.ne.s32.totalorder %s182, %s183
      %p195 = scmp.eq.s32.totalorder %s33, 1
      %p196 = por %p194, %p195
      %p198 = scmp.ne.s32.totalorder %s183, %s197
      %p199 = scmp.eq.s32.totalorder %s33, 0
      %p200 = por %p198, %p199
      %s201 = ssub.s32 %s34, %s46
      %s202 = ssub.s32 %s35, %s42
      %s203 = sor.u32 %s201, %s202
      %p204 = scmp.eq.s32.totalorder %s203, 0
      %s206 = sadd.s32 %s205, 1
      %s207 = scalar_select %p204, %s205, %s206
      %p210 = pneg %p204
      %p211 = scmp.eq.s32.totalorder %s27, 1
      %p212 = por %p210, %p211
      %p213 = scmp.ne.s32.totalorder %s205, %s208
      %p214 = scmp.eq.s32.totalorder %s27, 0
      %p215 = por %p213, %p214
      %p216 = scmp.ne.s32.totalorder %s205, %s208
      %p217 = scmp.eq.s32.totalorder %s32, 1
      %p218 = por %p216, %p217
      %p219 = scmp.ne.s32.totalorder %s208, %s209
      %p220 = scmp.eq.s32.totalorder %s32, 0
      %p221 = por %p219, %p220
      %p222 = scmp.ne.s32.totalorder %s208, %s209
      %p223 = scmp.eq.s32.totalorder %s33, 1
      %p224 = por %p222, %p223
      %p226 = scmp.ne.s32.totalorder %s209, %s225
      %p227 = scmp.eq.s32.totalorder %s33, 0
      %p228 = por %p226, %p227
      %s229 = ssub.s32 %s34, %s46
      %s230 = ssub.s32 %s35, %s42
      %s231 = sor.u32 %s229, %s230
      %p232 = scmp.eq.s32.totalorder %s231, 0
      %s234 = sadd.s32 %s233, 1
      %s235 = scalar_select %p232, %s233, %s234
      %p238 = pneg %p232
      %p239 = scmp.eq.s32.totalorder %s27, 1
      %p240 = por %p238, %p239
      %p241 = scmp.ne.s32.totalorder %s233, %s236
      %p242 = scmp.eq.s32.totalorder %s27, 0
      %p243 = por %p241, %p242
      %p244 = scmp.ne.s32.totalorder %s233, %s236
      %p245 = scmp.eq.s32.totalorder %s32, 1
      %p246 = por %p244, %p245
      %p247 = scmp.ne.s32.totalorder %s236, %s237
      %p248 = scmp.eq.s32.totalorder %s32, 0
      %p249 = por %p247, %p248
      %p250 = scmp.ne.s32.totalorder %s236, %s237
      %p251 = scmp.eq.s32.totalorder %s33, 1
      %p252 = por %p250, %p251
      %p254 = scmp.ne.s32.totalorder %s237, %s253
      %p255 = scmp.eq.s32.totalorder %s33, 0
      %p256 = por %p254, %p255
      %s257 = ssub.s32 %s34, %s46
      %s258 = ssub.s32 %s35, %s42
      %s259 = sor.u32 %s257, %s258
      %p260 = scmp.eq.s32.totalorder %s259, 0
      %s262 = sadd.s32 %s261, 1
      %s263 = scalar_select %p260, %s261, %s262
      %p266 = pneg %p260
      %p267 = scmp.eq.s32.totalorder %s27, 1
      %p268 = por %p266, %p267
      %p269 = scmp.ne.s32.totalorder %s261, %s264
      %p270 = scmp.eq.s32.totalorder %s27, 0
      %p271 = por %p269, %p270
      %p272 = scmp.ne.s32.totalorder %s261, %s264
      %p273 = scmp.eq.s32.totalorder %s32, 1
      %p274 = por %p272, %p273
      %p275 = scmp.ne.s32.totalorder %s264, %s265
      %p276 = scmp.eq.s32.totalorder %s32, 0
      %p277 = por %p275, %p276
      %p278 = scmp.ne.s32.totalorder %s264, %s265
      %p279 = scmp.eq.s32.totalorder %s33, 1
      %p280 = por %p278, %p279
      %p282 = scmp.ne.s32.totalorder %s265, %s281
      %p283 = scmp.eq.s32.totalorder %s33, 0
      %p284 = por %p282, %p283
      %p285 = scmp.le.s32.totalorder 1, %s27
      %p286 = scmp.lt.s32.totalorder %s27, 3
      %p287 = pnand %p285, %p286
      %p288 = pneg %p287
      // Predicated region
      $region9: #{tpu_custom_call.1} parent=5 // pred_check
        _
      $region10: #{tpu_custom_call.1} parent=5 // pred_check_branch
        %290 = sbr.rel (%p287) target = $region12
      $region11: #{tpu_custom_call.1} parent=5 // pred_region
        %s291 = ssub.s32 %s27, 1
        // Predicated region
        $region13: #{tpu_custom_call.1} parent=11 // pred_check
          %p292 = pneg %p88
        $region14: #{tpu_custom_call.1} parent=11 // pred_check_branch
          %294 = sbr.rel (%p292) target = $region16
        $region15: #{tpu_custom_call.1} parent=11 // pred_region
          %s296 = ssub.s32 256, 256
          %297 = vsyncadd [#allocation6], %s296
          %s298 = sshll.u32 [#allocation5], 4
          %s299 = int_to_ptr.vmem [resolvable:$true] %s298
          %304 = dma.hbm_to_vmem [thread:$0]  %s1, 256, %s299, [#allocation6], 64, 64, 4
        $region16: #{tpu_custom_call.1} parent=11 // pred_fallthru
          _
        // Predicated region
        $region17: #{tpu_custom_call.1} parent=11 // pred_check
          %p305 = pneg %p109
        $region18: #{tpu_custom_call.1} parent=11 // pred_check_branch
          %307 = sbr.rel (%p305) target = $region20
        $region19: #{tpu_custom_call.1} parent=11 // pred_region
          %s309 = ssub.s32 256, 256
          %310 = vsyncadd [#allocation6], %s309
          %s311 = sshll.u32 [#allocation7], 4
          %s312 = int_to_ptr.vmem [resolvable:$true] %s311
          %317 = dma.hbm_to_vmem [thread:$0]  %s2, 256, %s312, [#allocation6], 64, 64, 4
        $region20: #{tpu_custom_call.1} parent=11 // pred_fallthru
          _
        // Predicated region
        $region21: #{tpu_custom_call.1} parent=11 // pred_check
          %p318 = pneg %p130
        $region22: #{tpu_custom_call.1} parent=11 // pred_check_branch
          %320 = sbr.rel (%p318) target = $region24
        $region23: #{tpu_custom_call.1} parent=11 // pred_region
          %s322 = ssub.s32 256, 256
          %323 = vsyncadd [#allocation9], %s322
          %s324 = sshll.u32 [#allocation8], 4
          %s325 = int_to_ptr.vmem [resolvable:$true] %s324
          %330 = dma.hbm_to_vmem [thread:$0]  %s3, 256, %s325, [#allocation9], 64, 64, 4
        $region24: #{tpu_custom_call.1} parent=11 // pred_fallthru
          _
        // Predicated region
        $region25: #{tpu_custom_call.1} parent=11 // pred_check
          %p331 = pneg %p151
        $region26: #{tpu_custom_call.1} parent=11 // pred_check_branch
          %333 = sbr.rel (%p331) target = $region28
        $region27: #{tpu_custom_call.1} parent=11 // pred_region
          _
        $region28: #{tpu_custom_call.1} parent=11 // pred_fallthru
          _
        // Predicated region
        $region29: #{tpu_custom_call.1} parent=11 // pred_check
          %p334 = pneg %p172
        $region30: #{tpu_custom_call.1} parent=11 // pred_check_branch
          %336 = sbr.rel (%p334) target = $region32
        $region31: #{tpu_custom_call.1} parent=11 // pred_region
          _
        $region32: #{tpu_custom_call.1} parent=11 // pred_fallthru
          _
        // Predicated region
        $region33: #{tpu_custom_call.1} parent=11 // pred_check
          %p337 = pneg %p193
        $region34: #{tpu_custom_call.1} parent=11 // pred_check_branch
          %339 = sbr.rel (%p337) target = $region36
        $region35: #{tpu_custom_call.1} parent=11 // pred_region
          _
        $region36: #{tpu_custom_call.1} parent=11 // pred_fallthru
          _
      $region12: #{tpu_custom_call.1} parent=5 // pred_fallthru
        _
      %p340 = scmp.lt.s32.totalorder %s27, 2
      // Predicated region
      $region37: #{tpu_custom_call.1} parent=5 // pred_check
        %p341 = pneg %p340
      $region38: #{tpu_custom_call.1} parent=5 // pred_check_branch
        %343 = sbr.rel (%p341) target = $region40
      $region39: #{tpu_custom_call.1} parent=5 // pred_region
        // Predicated region
        $region41: #{tpu_custom_call.1} parent=39 // pred_check
          %p344 = pneg %p61
        $region42: #{tpu_custom_call.1} parent=39 // pred_check_branch
          %346 = sbr.rel (%p344) target = $region44
        $region43: #{tpu_custom_call.1} parent=39 // pred_region
          %s347 = sand.u32 %s51, 1
          %s348 = scalar_lea.sflag [#allocation3], %s347
          %s349 = sand.u32 %s51, 1
          %s350 = smul.addr %s349, 4
          %s351 = scalar_lea.vmem [#allocation2], %s350
          %s353 = ssub.s32 64, 64
          %354 = vsyncadd %s348, %s353
          %s355 = sadd.s32 %s35, %s34
          %s356 = smul.addr %s355, 64
          %s357 = scalar_lea.hbm %s0, %s356
          %s359 = sshll.u32 %s351, 4
          %s360 = int_to_ptr.vmem [resolvable:$true] %s359
          %362 = dma.hbm_to_vmem [thread:$0]  %s357, 64, %s360, %s348
        $region44: #{tpu_custom_call.1} parent=39 // pred_fallthru
          _
      $region40: #{tpu_custom_call.1} parent=5 // pred_fallthru
        _
      %p363 = scmp.le.s32.totalorder 1, %s27
      %p364 = scmp.lt.s32.totalorder %s27, 3
      %p365 = pnand %p363, %p364
      %p366 = pneg %p365
      // Predicated region
      $region45: #{tpu_custom_call.1} parent=5 // pred_check
        _
      $region46: #{tpu_custom_call.1} parent=5 // pred_check_branch
        %368 = sbr.rel (%p365) target = $region48
      $region47: #{tpu_custom_call.1} parent=5 // pred_region
        %s369 = ssub.s32 %s27, 1
        %s370 = sand.u32 %s54, 1
        %s371 = scalar_lea.sflag [#allocation3], %s370
        %s372 = sand.u32 %s54, 1
        %s373 = smul.addr %s372, 4
        %s374 = scalar_lea.vmem [#allocation2], %s373
        // Predicated region
        $region49: #{tpu_custom_call.1} parent=47 // pred_check
          %p375 = pneg %p67
        $region50: #{tpu_custom_call.1} parent=47 // pred_check_branch
          %377 = sbr.rel (%p375) target = $region52
        $region51: #{tpu_custom_call.1} parent=47 // pred_region
          %378 = dma.done %s371, 64
        $region52: #{tpu_custom_call.1} parent=47 // pred_fallthru
          _
        // Predicated region
        $region53: #{tpu_custom_call.1} parent=47 // pred_check
          %p379 = pneg %p88
        $region54: #{tpu_custom_call.1} parent=47 // pred_check_branch
          %381 = sbr.rel (%p379) target = $region56
        $region55: #{tpu_custom_call.1} parent=47 // pred_region
          %382 = dma.done [#allocation6], 256
        $region56: #{tpu_custom_call.1} parent=47 // pred_fallthru
          _
        // Predicated region
        $region57: #{tpu_custom_call.1} parent=47 // pred_check
          %p383 = pneg %p109
        $region58: #{tpu_custom_call.1} parent=47 // pred_check_branch
          %385 = sbr.rel (%p383) target = $region60
        $region59: #{tpu_custom_call.1} parent=47 // pred_region
          %386 = dma.done [#allocation6], 256
        $region60: #{tpu_custom_call.1} parent=47 // pred_fallthru
          _
        // Predicated region
        $region61: #{tpu_custom_call.1} parent=47 // pred_check
          %p387 = pneg %p130
        $region62: #{tpu_custom_call.1} parent=47 // pred_check_branch
          %389 = sbr.rel (%p387) target = $region64
        $region63: #{tpu_custom_call.1} parent=47 // pred_region
          %390 = dma.done [#allocation9], 256
        $region64: #{tpu_custom_call.1} parent=47 // pred_fallthru
          _
        %s391 = sand.u32 %s54, 1
        %s392 = scalar_lea.sflag [#allocation3], %s391
        %s393 = sand.u32 %s54, 1
        %s394 = smul.addr %s393, 4
        %s395 = scalar_lea.vmem [#allocation2], %s394
        %p396 = pneg %p67
        %p397 = pneg %p64
        %p398 = pneg %p88
        %p399 = pneg %p85
        %p400 = pneg %p109
        %p401 = pneg %p106
        %p402 = pneg %p130
        %p403 = pneg %p127
        %p404 = pneg %p151
        %p405 = pneg %p148
        %p406 = pneg %p172
        %p407 = pneg %p169
        %p408 = pneg %p193
        %p409 = pneg %p190
        %p410 = pneg %p221
        %p411 = pneg %p218
        %s412 = sand.u32 %s208, 1
        %s413 = scalar_lea.sflag [#allocation4], %s412
        %s414 = sand.u32 %s208, 1
        %s415 = smul.addr %s414, 16
        %s416 = scalar_lea.vmem [#allocation10], %s415
        %p417 = pneg %p249
        %p418 = pneg %p246
        %s419 = sand.u32 %s32, 1
        %s420 = scalar_lea.sflag [#allocation12], %s419
        %s421 = sand.u32 %s236, 1
        %s422 = smul.addr %s421, 16
        %s423 = scalar_lea.vmem [#allocation11], %s422
        %p424 = pneg %p277
        %p425 = pneg %p274
        %s426 = sand.u32 %s32, 1
        %s427 = scalar_lea.sflag [#allocation12], %s426
        %s428 = sand.u32 %s264, 1
        %s429 = smul.addr %s428, 16
        %s430 = scalar_lea.vmem [#allocation13], %s429
        %v432 = vld [vmem:[%s374] sm:$0xf]
        %v433 = vld [vmem:[#allocation5] sm:$0xf]
        %v434 = vld [vmem:[#allocation5 + $0x4] sm:$0xf]
        %v435 = vld [vmem:[#allocation5 + $0x8] sm:$0xf]
        %v436 = vld [vmem:[#allocation5 + $0xc] sm:$0xf]
        %v437 = vld [vmem:[%s4] sm:$0x1]
        %v439 = vlaneseq
        %v440 = vshrl.u32 %v439, 7
        %v441 = vsub.s32 0, %v440
        %v442 = vrot.slane %v437, %v441
        %v448 = vunpack.c.l.b16 %v433
        %v449 = vunpack.c.l.b16 %v434
        %v450 = vunpack.c.l.b16 %v435
        %v451 = vunpack.c.l.b16 %v436
        %v452 = vpack.c.b16 %v449, %v448
        %v453 = vpack.c.b16 %v451, %v450
        %vm456 = vcmask 261120
        %v458 = vsel %vm456, %v432, 0
        %460 = vmatprep.subr.bf16.mxu0 0
        %461 = vmatpush1.bf16.msra.mxu0 %v452
        %462 = vmatprep.subr.bf16.mxu0 0
        %463 = vmatpush1.bf16.msra.mxu0 %v453
        %464 = vmatprep.subr.bf16.mxu0 0
        %465 = vmatpush1.bf16.msra.mxu0 0
        %466 = vmatprep.subr.bf16.mxu0 0
        %467 = vmatpush1.bf16.msra.mxu0 0
        %468 = vmatprep.subr.bf16.mxu0 0
        %469 = vmatpush1.bf16.msra.mxu0 0
        %470 = vmatprep.subr.bf16.mxu0 0
        %471 = vmatpush1.bf16.msra.mxu0 0
        %472 = vmatprep.subr.bf16.mxu0 0
        %473 = vmatpush1.bf16.msra.mxu0 0
        %474 = vmatprep.subr.bf16.mxu0 0
        %475 = vmatpush1.bf16.msra.mxu0 0
        %476 = vmatprep.subr.bf16.mxu0 0
        %477 = vmatpush1.bf16.msra.mxu0 0
        %478 = vmatprep.subr.bf16.mxu0 0
        %479 = vmatpush1.bf16.msra.mxu0 0
        %480 = vmatprep.subr.bf16.mxu0 0
        %481 = vmatpush1.bf16.msra.mxu0 0
        %482 = vmatprep.subr.bf16.mxu0 0
        %483 = vmatpush1.bf16.msra.mxu0 0
        %484 = vmatprep.subr.bf16.mxu0 0
        %485 = vmatpush1.bf16.msra.mxu0 0
        %486 = vmatprep.subr.bf16.mxu0 0
        %487 = vmatpush1.bf16.msra.mxu0 0
        %488 = vmatprep.subr.bf16.mxu0 0
        %489 = vmatpush1.bf16.msra.mxu0 0
        %490 = vmatprep.subr.bf16.mxu0 0
        %491 = vmatpush1.bf16.msra.mxu0 0
        %492 = vmatprep.mubr.bf16.mxu0 0
        %493 = vmatmul.mubr.bf16.gmra.mrb[0].mxu0 %v458
        %v494 = vpop.f32.mrb[0].mxu0
        %v495 = vadd.f32 %v442, %v494
        %v496 = vpop.f32.mrb[0].mxu0
        %v497 = vpop.f32.mrb[0].mxu0
        %v498 = vpop.f32.mrb[0].mxu0
        %499 = vdwg.mxu0
        %v500 = vpack.c.bf16 %v495, %v495
        %vm501 = vcmask 60416
        %502 = vst.msk [vmem:[%s416] sm:$0xf] %vm501, %v500
        %v504 = vunpack.c.l.b16 %v500
        %v505 = vpack.c.b16 %v504, %v504
        %506 = vrot.lane.b32.xlu0 %v505, 120
        %v507 = vpop.permute.xlu0 %506
        %s509 = scalar_lea.vmem %s416, 4 [#allocation10]
        %510 = vst.msk [vmem:[%s509] sm:$0xf] %vm501, %v507
        %511 = vrot.lane.b32.xlu0 %v505, 112
        %v512 = vpop.permute.xlu0 %511
        %s514 = scalar_lea.vmem %s416, 8 [#allocation10]
        %515 = vst.msk [vmem:[%s514] sm:$0xf] %vm501, %v512
        %516 = vrot.lane.b32.xlu0 %v505, 104
        %v517 = vpop.permute.xlu0 %516
        %s519 = scalar_lea.vmem %s416, 12 [#allocation10]
        %520 = vst.msk [vmem:[%s519] sm:$0xf] %vm501, %v517
        %v521 = vld [vmem:[#allocation7] sm:$0xf]
        %v522 = vld [vmem:[#allocation7 + $0x4] sm:$0xf]
        %v523 = vld [vmem:[#allocation7 + $0x8] sm:$0xf]
        %v524 = vld [vmem:[#allocation7 + $0xc] sm:$0xf]
        %v525 = vld [vmem:[%s5] sm:$0x1]
        %v527 = vlaneseq
        %v528 = vshrl.u32 %v527, 7
        %v529 = vsub.s32 0, %v528
        %v530 = vrot.slane %v525, %v529
        %v536 = vunpack.c.l.b16 %v521
        %v537 = vunpack.c.l.b16 %v522
        %v538 = vunpack.c.l.b16 %v523
        %v539 = vunpack.c.l.b16 %v524
        %v540 = vpack.c.b16 %v537, %v536
        %v541 = vpack.c.b16 %v539, %v538
        %544 = vmatprep.subr.bf16.mxu0 0
        %545 = vmatpush1.bf16.msra.mxu0 %v540
        %546 = vmatprep.subr.bf16.mxu0 0
        %547 = vmatpush1.bf16.msra.mxu0 %v541
        %548 = vmatprep.subr.bf16.mxu0 0
        %549 = vmatpush1.bf16.msra.mxu0 0
        %550 = vmatprep.subr.bf16.mxu0 0
        %551 = vmatpush1.bf16.msra.mxu0 0
        %552 = vmatprep.subr.bf16.mxu0 0
        %553 = vmatpush1.bf16.msra.mxu0 0
        %554 = vmatprep.subr.bf16.mxu0 0
        %555 = vmatpush1.bf16.msra.mxu0 0
        %556 = vmatprep.subr.bf16.mxu0 0
        %557 = vmatpush1.bf16.msra.mxu0 0
        %558 = vmatprep.subr.bf16.mxu0 0
        %559 = vmatpush1.bf16.msra.mxu0 0
        %560 = vmatprep.subr.bf16.mxu0 0
        %561 = vmatpush1.bf16.msra.mxu0 0
        %562 = vmatprep.subr.bf16.mxu0 0
        %563 = vmatpush1.bf16.msra.mxu0 0
        %564 = vmatprep.subr.bf16.mxu0 0
        %565 = vmatpush1.bf16.msra.mxu0 0
        %566 = vmatprep.subr.bf16.mxu0 0
        %567 = vmatpush1.bf16.msra.mxu0 0
        %568 = vmatprep.subr.bf16.mxu0 0
        %569 = vmatpush1.bf16.msra.mxu0 0
        %570 = vmatprep.subr.bf16.mxu0 0
        %571 = vmatpush1.bf16.msra.mxu0 0
        %572 = vmatprep.subr.bf16.mxu0 0
        %573 = vmatpush1.bf16.msra.mxu0 0
        %574 = vmatprep.subr.bf16.mxu0 0
        %575 = vmatpush1.bf16.msra.mxu0 0
        %576 = vmatprep.mubr.bf16.mxu0 0
        %577 = vmatmul.mubr.bf16.gmra.mrb[0].mxu0 %v458
        %v578 = vpop.f32.mrb[0].mxu0
        %v579 = vadd.f32 %v530, %v578
        %v580 = vpop.f32.mrb[0].mxu0
        %v581 = vpop.f32.mrb[0].mxu0
        %v582 = vpop.f32.mrb[0].mxu0
        %583 = vdwg.mxu0
        %v584 = vpack.c.bf16 %v579, %v579
        %585 = vst.msk [vmem:[%s423] sm:$0xf] %vm501, %v584
        %v587 = vunpack.c.l.b16 %v584
        %v588 = vpack.c.b16 %v587, %v587
        %589 = vrot.lane.b32.xlu0 %v588, 120
        %v590 = vpop.permute.xlu0 %589
        %s592 = scalar_lea.vmem %s423, 4 [#allocation11]
        %593 = vst.msk [vmem:[%s592] sm:$0xf] %vm501, %v590
        %594 = vrot.lane.b32.xlu0 %v588, 112
        %v595 = vpop.permute.xlu0 %594
        %s597 = scalar_lea.vmem %s423, 8 [#allocation11]
        %598 = vst.msk [vmem:[%s597] sm:$0xf] %vm501, %v595
        %599 = vrot.lane.b32.xlu0 %v588, 104
        %v600 = vpop.permute.xlu0 %599
        %s602 = scalar_lea.vmem %s423, 12 [#allocation11]
        %603 = vst.msk [vmem:[%s602] sm:$0xf] %vm501, %v600
        %v604 = vld [vmem:[#allocation8] sm:$0xf]
        %v605 = vld [vmem:[#allocation8 + $0x4] sm:$0xf]
        %v606 = vld [vmem:[#allocation8 + $0x8] sm:$0xf]
        %v607 = vld [vmem:[#allocation8 + $0xc] sm:$0xf]
        %v608 = vld [vmem:[%s6] sm:$0x1]
        %v610 = vlaneseq
        %v611 = vshrl.u32 %v610, 7
        %v612 = vsub.s32 0, %v611
        %v613 = vrot.slane %v608, %v612
        %v619 = vunpack.c.l.b16 %v604
        %v620 = vunpack.c.l.b16 %v605
        %v621 = vunpack.c.l.b16 %v606
        %v622 = vunpack.c.l.b16 %v607
        %v623 = vpack.c.b16 %v620, %v619
        %v624 = vpack.c.b16 %v622, %v621
        %627 = vmatprep.subr.bf16.mxu0 0
        %628 = vmatpush1.bf16.msra.mxu0 %v623
        %629 = vmatprep.subr.bf16.mxu0 0
        %630 = vmatpush1.bf16.msra.mxu0 %v624
        %631 = vmatprep.subr.bf16.mxu0 0
        %632 = vmatpush1.bf16.msra.mxu0 0
        %633 = vmatprep.subr.bf16.mxu0 0
        %634 = vmatpush1.bf16.msra.mxu0 0
        %635 = vmatprep.subr.bf16.mxu0 0
        %636 = vmatpush1.bf16.msra.mxu0 0
        %637 = vmatprep.subr.bf16.mxu0 0
        %638 = vmatpush1.bf16.msra.mxu0 0
        %639 = vmatprep.subr.bf16.mxu0 0
        %640 = vmatpush1.bf16.msra.mxu0 0
        %641 = vmatprep.subr.bf16.mxu0 0
        %642 = vmatpush1.bf16.msra.mxu0 0
        %643 = vmatprep.subr.bf16.mxu0 0
        %644 = vmatpush1.bf16.msra.mxu0 0
        %645 = vmatprep.subr.bf16.mxu0 0
        %646 = vmatpush1.bf16.msra.mxu0 0
        %647 = vmatprep.subr.bf16.mxu0 0
        %648 = vmatpush1.bf16.msra.mxu0 0
        %649 = vmatprep.subr.bf16.mxu0 0
        %650 = vmatpush1.bf16.msra.mxu0 0
        %651 = vmatprep.subr.bf16.mxu0 0
        %652 = vmatpush1.bf16.msra.mxu0 0
        %653 = vmatprep.subr.bf16.mxu0 0
        %654 = vmatpush1.bf16.msra.mxu0 0
        %655 = vmatprep.subr.bf16.mxu0 0
        %656 = vmatpush1.bf16.msra.mxu0 0
        %657 = vmatprep.subr.bf16.mxu0 0
        %658 = vmatpush1.bf16.msra.mxu0 0
        %659 = vmatprep.mubr.bf16.mxu0 0
        %660 = vmatmul.mubr.bf16.gmra.mrb[0].mxu0 %v458
        %v661 = vpop.f32.mrb[0].mxu0
        %v662 = vadd.f32 %v613, %v661
        %v663 = vpop.f32.mrb[0].mxu0
        %v664 = vpop.f32.mrb[0].mxu0
        %v665 = vpop.f32.mrb[0].mxu0
        %666 = vdwg.mxu0
        %v667 = vpack.c.bf16 %v662, %v662
        %668 = vst.msk [vmem:[%s430] sm:$0xf] %vm501, %v667
        %v670 = vunpack.c.l.b16 %v667
        %v671 = vpack.c.b16 %v670, %v670
        %672 = vrot.lane.b32.xlu0 %v671, 120
        %v673 = vpop.permute.xlu0 %672
        %s675 = scalar_lea.vmem %s430, 4 [#allocation13]
        %676 = vst.msk [vmem:[%s675] sm:$0xf] %vm501, %v673
        %677 = vrot.lane.b32.xlu0 %v671, 112
        %v678 = vpop.permute.xlu0 %677
        %s680 = scalar_lea.vmem %s430, 8 [#allocation13]
        %681 = vst.msk [vmem:[%s680] sm:$0xf] %vm501, %v678
        %682 = vrot.lane.b32.xlu0 %v671, 104
        %v683 = vpop.permute.xlu0 %682
        %s685 = scalar_lea.vmem %s430, 12 [#allocation13]
        %686 = vst.msk [vmem:[%s685] sm:$0xf] %vm501, %v683
        %s687 = sand.u32 %s208, 1
        %s688 = scalar_lea.sflag [#allocation4], %s687
        %s689 = sand.u32 %s208, 1
        %s690 = smul.addr %s689, 16
        %s691 = scalar_lea.vmem [#allocation10], %s690
        %s692 = sand.u32 %s32, 1
        %s693 = scalar_lea.sflag [#allocation12], %s692
        %s694 = sand.u32 %s236, 1
        %s695 = smul.addr %s694, 16
        %s696 = scalar_lea.vmem [#allocation11], %s695
        %s697 = sand.u32 %s32, 1
        %s698 = scalar_lea.sflag [#allocation12], %s697
        %s699 = sand.u32 %s264, 1
        %s700 = smul.addr %s699, 16
        %s701 = scalar_lea.vmem [#allocation13], %s700
        // Predicated region
        $region65: #{tpu_custom_call.1} parent=47 // pred_check
          %p702 = pneg %p218
        $region66: #{tpu_custom_call.1} parent=47 // pred_check_branch
          %704 = sbr.rel (%p702) target = $region68
        $region67: #{tpu_custom_call.1} parent=47 // pred_region
          %s706 = ssub.s32 256, 256
          %707 = vsyncadd %s688, %s706
          %s708 = smul.addr %s36, 4
          %s709 = sadd.s32 %s37, %s708
          %s710 = smul.addr %s709, 64
          %s711 = scalar_lea.hbm %s7, %s710
          %s712 = sshll.u32 %s691, 4
          %s713 = int_to_ptr.vmem [resolvable:$true] %s712
          %718 = dma.vmem_to_hbm [thread:$0]  %s713, 256, %s711, %s688, 64, 64, 4
        $region68: #{tpu_custom_call.1} parent=47 // pred_fallthru
          _
        // Predicated region
        $region69: #{tpu_custom_call.1} parent=47 // pred_check
          %p719 = pneg %p246
        $region70: #{tpu_custom_call.1} parent=47 // pred_check_branch
          %721 = sbr.rel (%p719) target = $region72
        $region71: #{tpu_custom_call.1} parent=47 // pred_region
          %s723 = ssub.s32 256, 256
          %724 = vsyncadd %s693, %s723
          %s725 = smul.addr %s36, 4
          %s726 = sadd.s32 %s37, %s725
          %s727 = smul.addr %s726, 64
          %s728 = scalar_lea.hbm %s8, %s727
          %s729 = sshll.u32 %s696, 4
          %s730 = int_to_ptr.vmem [resolvable:$true] %s729
          %735 = dma.vmem_to_hbm [thread:$0]  %s730, 256, %s728, %s693, 64, 64, 4
        $region72: #{tpu_custom_call.1} parent=47 // pred_fallthru
          _
        // Predicated region
        $region73: #{tpu_custom_call.1} parent=47 // pred_check
          %p736 = pneg %p274
        $region74: #{tpu_custom_call.1} parent=47 // pred_check_branch
          %738 = sbr.rel (%p736) target = $region76
        $region75: #{tpu_custom_call.1} parent=47 // pred_region
          %s740 = ssub.s32 256, 256
          %741 = vsyncadd %s698, %s740
          %s742 = smul.addr %s36, 4
          %s743 = sadd.s32 %s37, %s742
          %s744 = smul.addr %s743, 64
          %s745 = scalar_lea.hbm %s9, %s744
          %s746 = sshll.u32 %s701, 4
          %s747 = int_to_ptr.vmem [resolvable:$true] %s746
          %752 = dma.vmem_to_hbm [thread:$0]  %s747, 256, %s745, %s698, 64, 64, 4
        $region76: #{tpu_custom_call.1} parent=47 // pred_fallthru
          _
      $region48: #{tpu_custom_call.1} parent=5 // pred_fallthru
        _
      %p753 = scmp.le.s32.totalorder 2, %s27
      // Predicated region
      $region77: #{tpu_custom_call.1} parent=5 // pred_check
        %p754 = pneg %p753
      $region78: #{tpu_custom_call.1} parent=5 // pred_check_branch
        %756 = sbr.rel (%p754) target = $region80
      $region79: #{tpu_custom_call.1} parent=5 // pred_region
        %s757 = ssub.s32 %s27, 2
        // Predicated region
        $region81: #{tpu_custom_call.1} parent=79 // pred_check
          %p758 = pneg %p224
        $region82: #{tpu_custom_call.1} parent=79 // pred_check_branch
          %760 = sbr.rel (%p758) target = $region84
        $region83: #{tpu_custom_call.1} parent=79 // pred_region
          %s761 = sand.u32 %s209, 1
          %s762 = scalar_lea.sflag [#allocation4], %s761
          %s763 = sand.u32 %s209, 1
          %s764 = smul.addr %s763, 16
          %s765 = scalar_lea.vmem [#allocation10], %s764
          %766 = dma.done %s762, 256
        $region84: #{tpu_custom_call.1} parent=79 // pred_fallthru
          _
        // Predicated region
        $region85: #{tpu_custom_call.1} parent=79 // pred_check
          %p767 = pneg %p252
        $region86: #{tpu_custom_call.1} parent=79 // pred_check_branch
          %769 = sbr.rel (%p767) target = $region88
        $region87: #{tpu_custom_call.1} parent=79 // pred_region
          %s770 = sand.u32 %s33, 1
          %s771 = scalar_lea.sflag [#allocation12], %s770
          %s772 = sand.u32 %s237, 1
          %s773 = smul.addr %s772, 16
          %s774 = scalar_lea.vmem [#allocation11], %s773
          %775 = dma.done %s771, 256
        $region88: #{tpu_custom_call.1} parent=79 // pred_fallthru
          _
        // Predicated region
        $region89: #{tpu_custom_call.1} parent=79 // pred_check
          %p776 = pneg %p280
        $region90: #{tpu_custom_call.1} parent=79 // pred_check_branch
          %778 = sbr.rel (%p776) target = $region92
        $region91: #{tpu_custom_call.1} parent=79 // pred_region
          %s779 = sand.u32 %s33, 1
          %s780 = scalar_lea.sflag [#allocation12], %s779
          %s781 = sand.u32 %s265, 1
          %s782 = smul.addr %s781, 16
          %s783 = scalar_lea.vmem [#allocation13], %s782
          %784 = dma.done %s780, 256
        $region92: #{tpu_custom_call.1} parent=79 // pred_fallthru
          _
      $region80: #{tpu_custom_call.1} parent=5 // pred_fallthru
        _
    $region6: #{tpu_custom_call.1} parent=1 // loop_footer
      %s31 = sadd.s32 1, %s27
    $region7: #{tpu_custom_call.1} parent=1 // loop_footer_branch
      %26 = sbr.rel target = $region3
    $region8: #{tpu_custom_call.1} parent=1 // loop_exit
      _
    %785 = vsyncpa [#allocation3], 1
    %s786 = scalar_lea.sflag [#allocation3], 1
    %787 = vsyncpa %s786, 1
    %788 = vsyncpa [#allocation6], 1
    %789 = vsyncpa [#allocation9], 1
    %790 = vsyncpa [#allocation4], 1
    %s791 = scalar_lea.sflag [#allocation4], 1
    %792 = vsyncpa %s791, 1
    %793 = vsyncpa [#allocation12], 1
    %s794 = scalar_lea.sflag [#allocation12], 1
    %795 = vsyncpa %s794, 1

</llo_original>
